<compile_context>
chip_gen: v5e
topology: v5e:2x2
jax: 0.10.0
libtpu: 0.0.40
codegen_flags: <defaults>
</compile_context>

<pallas_src>
import functools

import jax
import jax.numpy as jnp
from jax.experimental import pallas as pl
from jax.experimental.pallas import tpu as pltpu


# --------------------------------------------------------------------------- #
# Kernel
# --------------------------------------------------------------------------- #
def _cifpn_kernel(b_ref, *refs, num_levels, keep_levels):
    """out[0, f] = sum_k B[f, k] * x_k  -- VPU weighted sum over one tile.

    b_ref               : (keep, F) mixing matrix B in SMEM (scalar reads)
    refs[0 .. F-1]      : per-level input tiles, each (1, TC, THW) in VMEM
    refs[F]             : output tile (1, keep, TC, THW) in VMEM

    Loads are streamed per multiply-add term (not hoisted into a list), so at
    most one input tile plus one f32 accumulator is nominally live at a time.
    """
    x_refs = refs[:num_levels]
    o_ref = refs[num_levels]
    for f in range(keep_levels):
        acc = x_refs[0][0, :, :].astype(jnp.float32) * b_ref[f, 0]
        for k in range(1, num_levels):
            acc = acc + x_refs[k][0, :, :].astype(jnp.float32) * b_ref[f, k]
        # TODO(synk): on v7x with bf16 inputs a bf16 accumulation would further
        # guarantee the kernel stays HBM-bound; kept f32 for accuracy.
        o_ref[0, f, :, :] = acc.astype(o_ref.dtype)


# --------------------------------------------------------------------------- #
# Host-side helpers
# --------------------------------------------------------------------------- #
def _fold_weights(weights, F, epsilon):
    """Fold the full CIFPN recurrence into one exact (F, F) matrix B."""
    w = jnp.asarray(weights).astype(jnp.float32)          # (F, F, F)
    w_norm = w / (w * jax.nn.sigmoid(w) + epsilon)        # per-scalar swish-norm
    A = jnp.sum(w_norm, axis=1)                           # bu = A @ x
    A2 = A @ A                                             # per-level top-down increment
    if F > 1:
        S = jnp.concatenate(
            [jnp.cumsum(A2[:F - 1][::-1], axis=0)[::-1],
             jnp.zeros((1, F), jnp.float32)], axis=0)      # S[i] = sum_{m=i}^{F-2} A2[m]
    else:
        S = jnp.zeros((1, F), jnp.float32)
    return A + A[F - 1:F, :] + S                           # fused[i] = B[i] @ x


def _vmem_capacity_bytes():
    """Per-core VMEM capacity (generation-aware); conservative fallback."""
    try:
        return int(pltpu.get_tpu_info().vmem_capacity_bytes)
    except Exception:
        return 64 << 20   # v7x per-TC value; safe lower bound for v5e/v6e too


def _select_tiles(C_eff, HW, itemsize, per_block_budget, N, min_steps=8):
    """Pick (TC, THW).

    Constraints: TC is a multiple of the native sublane packing that divides
    C_eff (or the full C_eff); THW is a multiple of 128 (or the full HW) so
    stores stay unmasked, lane-dense vst.
    Preference: fits per-operand block budget > as many grid steps as possible
    up to `min_steps` (pipeline depth + v7x megacore) > largest block
    (amortize per-step overhead) > THW divides HW (no masked boundary block)
    > widest THW.
    """
    sublane = 8 * max(1, 4 // itemsize)                    # 8 f32 / 16 bf16 / 32 int8
    c_cands = sorted({C_eff} |
                     {d for d in range(sublane, C_eff, sublane) if C_eff % d == 0})
    if HW <= 128:
        hw_cands = [HW]
    else:
        step = 128 * max(1, HW // (128 * 512))             # bound candidate count
        hw_cands = sorted({HW} | set(range(128, HW, step)))

    best_key, best = None, None
    for tc in c_cands:
        for thw in hw_cands:
            blk = tc * thw * itemsize
            fits = blk <= per_block_budget
            steps = N * (-(-C_eff // tc)) * (-(-HW // thw))
            key = (1 if fits else 0,
                   min(steps, min_steps) if fits else 0,
                   blk if fits else -blk,
                   1 if HW % thw == 0 else 0,
                   thw)
            if best_key is None or key > best_key:
                best_key, best = key, (tc, thw)
    return best


# --------------------------------------------------------------------------- #
# Public forward
# --------------------------------------------------------------------------- #
def cifpn_forward(xs, weights, *, epsilon=1e-4, out_channels=64):
    """xs: list of F arrays, each (N, C, H, W) (identical shapes/dtypes);
    weights: (F, F, F) scalar parameters."""
    F = len(xs)
    assert len({tuple(x.shape) for x in xs}) == 1, \
        "CIFPN kernel requires all pyramid levels to share (N, C, H, W)"
    assert len({x.dtype for x in xs}) == 1, "all levels must share a dtype"
    dtype = xs[0].dtype
    itemsize = jnp.dtype(dtype).itemsize
    N, C, H, W = xs[0].shape
    HW = H * W

    # ---- fold the whole recurrence into one exact (F, F) matrix (tiny, host side)
    B = _fold_weights(weights, F, epsilon)

    # ---- only levels / channels that survive the trailing [:, :out_channels] slice
    surviving = min(out_channels, F * C)
    keep = -(-surviving // C)                    # ceil(surviving / C)
    C_eff = surviving if keep == 1 else C        # keep==1: skip discarded channels entirely
    B = B[:keep]

    # ---- generation-aware VMEM budgeting (v7x: 64 MiB/TC, v5e/v6e: 128 MiB)
    vmem_cap = _vmem_capacity_bytes()
    budget_total = max(vmem_cap * 5 // 8, 16 << 20)        # double-buffered footprint budget
    per_block_budget = max(budget_total // (2 * (F + keep)), 8 * 128 * itemsize)
    TC, THW = _select_tiles(C_eff, HW, itemsize, per_block_budget, N)

    n_c = -(-C_eff // TC)
    n_hw = -(-HW // THW)
    grid = (N, n_c, n_hw)

    footprint = 2 * (F + keep) * TC * THW * itemsize       # double-buffered blocks
    vmem_limit = int(min(footprint + (16 << 20), vmem_cap * 9 // 10))
    vmem_limit = max(vmem_limit, footprint + (2 << 20))    # never below real footprint

    xs3 = [x.reshape(N, C, HW) for x in xs]                # free reshape, no copy

    in_specs = [pl.BlockSpec(memory_space=pltpu.MemorySpace.SMEM)]           # B scalars
    in_specs += [pl.BlockSpec((1, TC, THW), lambda n, c, h: (n, c, h))
                 for _ in range(F)]
    out_spec = pl.BlockSpec((1, keep, TC, THW), lambda n, c, h: (n, 0, c, h))

    out = pl.pallas_call(
        functools.partial(_cifpn_kernel, num_levels=F, keep_levels=keep),
        out_shape=jax.ShapeDtypeStruct((N, keep, C_eff, HW), dtype),
        grid=grid,
        in_specs=in_specs,
        out_specs=out_spec,
        compiler_params=pltpu.CompilerParams(
            dimension_semantics=("parallel", "parallel", "parallel"),
            vmem_limit_bytes=vmem_limit,
        ),
    )(B, *xs3)

    fused = out.reshape(N, keep * C_eff, H, W)             # free reshape
    return fused[:, :surviving, :, :]


# --------------------------------------------------------------------------- #
# Pure-JAX reference (direct transcription of the PyTorch forward)
# --------------------------------------------------------------------------- #
def cifpn_reference(xs, weights, epsilon=1e-4):
    F = len(xs)
    w = jnp.asarray(weights).astype(jnp.float32)

    def norm(i, j, k):
        wk = w[i, j, k]
        return wk / (wk * jax.nn.sigmoid(wk) + epsilon)

    bu = []
    for i in range(F):
        total = jnp.zeros_like(xs[i], dtype=jnp.float32)
        for j in range(F):
            ws = sum(norm(i, j, k) * xs[k].astype(jnp.float32) for k in range(F))
            total = total + ws
        bu.append(total)
    td = [bu[-1]]
    for i in range(F - 2, -1, -1):
        acc = td[-1]
        for j in range(F):
            acc = acc + sum(norm(i, j, k) * bu[k] for k in range(F))
        td.append(acc)
    td = td[::-1]
    fused = [td[i] + bu[i] for i in range(F)]
    return jnp.concatenate(fused, axis=1)[:, :64, :, :]


# --------------------------------------------------------------------------- #
# Self-test
# --------------------------------------------------------------------------- #
if __name__ == "__main__":
    key = jax.random.PRNGKey(0)
    kx, kw, kx2 = jax.random.split(key, 3)

    # ---- Case 1: F*C == 64 -> every level survives the [:, :64] slice (f32 I/O)
    F, N, C, H, W = 4, 2, 16, 16, 16
    keys = jax.random.split(kx, F)
    xs = [jax.random.normal(keys[i], (N, C, H, W), jnp.float32) for i in range(F)]
    # Module init is ones; perturb so every (i, j, k) weight is distinct.
    weights = 1.0 + 0.25 * jax.random.normal(kw, (F, F, F), jnp.float32)

    out = jax.block_until_ready(cifpn_forward(xs, weights))
    ref = jax.block_until_ready(cifpn_reference(xs, weights))
    assert out.shape == ref.shape == (N, 64, H, W), (out.shape, ref.shape)
    assert out.dtype == jnp.float32
    max_err = float(jnp.max(jnp.abs(out - ref)))
    assert jnp.allclose(out, ref, atol=1e-2, rtol=1e-3), max_err

    # ---- Case 2: bf16 pyramids -> bf16 I/O, f32 accumulation in-kernel
    xs_bf16 = [x.astype(jnp.bfloat16) for x in xs]
    out_bf = jax.block_until_ready(cifpn_forward(xs_bf16, weights))
    assert out_bf.shape == (N, 64, H, W) and out_bf.dtype == jnp.bfloat16
    assert jnp.allclose(out_bf.astype(jnp.float32), ref, rtol=0.05, atol=16.0), \
        float(jnp.max(jnp.abs(out_bf.astype(jnp.float32) - ref)))

    # ---- Case 3: C > 64 with keep == 1 -> kernel touches only surviving channels
    F2, N2, C2, H2, W2 = 2, 1, 128, 8, 8
    keys2 = jax.random.split(kx2, F2 + 1)
    xs2 = [jax.random.normal(keys2[i], (N2, C2, H2, W2), jnp.float32) for i in range(F2)]
    weights2 = 1.0 + 0.25 * jax.random.normal(keys2[-1], (F2, F2, F2), jnp.float32)
    out2 = jax.block_until_ready(cifpn_forward(xs2, weights2))
    ref2 = jax.block_until_ready(cifpn_reference(xs2, weights2))
    assert out2.shape == ref2.shape == (N2, 64, H2, W2), (out2.shape, ref2.shape)
    assert jnp.allclose(out2, ref2, atol=1e-2, rtol=1e-3), \
        float(jnp.max(jnp.abs(out2 - ref2)))

    print("KERNEL_OK")
</pallas_src>

<mosaic_0001>
module attributes {stable_mosaic.version = 11 : i64} {
  func.func @_cifpn_kernel(%arg0: i32, %arg1: i32, %arg2: i32, %arg3: memref<4x4xf32, #tpu.memory_space<smem>>, %arg4: memref<1x8x128xf32, #tpu.memory_space<vmem>>, %arg5: memref<1x8x128xf32, #tpu.memory_space<vmem>>, %arg6: memref<1x8x128xf32, #tpu.memory_space<vmem>>, %arg7: memref<1x8x128xf32, #tpu.memory_space<vmem>>, %arg8: memref<1x4x8x128xf32, #tpu.memory_space<vmem>>) attributes {dimension_semantics = [#tpu.dimension_semantics<parallel>, #tpu.dimension_semantics<parallel>, #tpu.dimension_semantics<parallel>], iteration_bounds = array<i64: 2, 2, 2>, scalar_prefetch = 0 : i64, scratch_operands = 0 : i64, tpu.core_type = #tpu.core_type<tc>, window_params = [{transform_indices = @transform_0, window_bounds = array<i64: 4, 4>}, {transform_indices = @transform_1, window_bounds = array<i64: 1, 8, 128>}, {transform_indices = @transform_2, window_bounds = array<i64: 1, 8, 128>}, {transform_indices = @transform_3, window_bounds = array<i64: 1, 8, 128>}, {transform_indices = @transform_4, window_bounds = array<i64: 1, 8, 128>}, {transform_indices = @transform_5, window_bounds = array<i64: 1, 4, 8, 128>}]} {
    %c0 = arith.constant 0 : index
    %c0_0 = arith.constant 0 : index
    %c0_1 = arith.constant 0 : index
    %0 = vector.load %arg4[%c0, %c0_0, %c0_1] : memref<1x8x128xf32, #tpu.memory_space<vmem>>, vector<1x8x128xf32>
    %1 = vector.shape_cast %0 : vector<1x8x128xf32> to vector<8x128xf32>
    %c0_2 = arith.constant 0 : index
    %c0_3 = arith.constant 0 : index
    %2 = memref.load %arg3[%c0_2, %c0_3] : memref<4x4xf32, #tpu.memory_space<smem>>
    %3 = vector.broadcast %2 : f32 to vector<8x128xf32>
    %4 = arith.mulf %1, %3 : vector<8x128xf32>
    %c0_4 = arith.constant 0 : index
    %c0_5 = arith.constant 0 : index
    %c0_6 = arith.constant 0 : index
    %5 = vector.load %arg5[%c0_4, %c0_5, %c0_6] : memref<1x8x128xf32, #tpu.memory_space<vmem>>, vector<1x8x128xf32>
    %6 = vector.shape_cast %5 : vector<1x8x128xf32> to vector<8x128xf32>
    %c0_7 = arith.constant 0 : index
    %c1 = arith.constant 1 : index
    %7 = memref.load %arg3[%c0_7, %c1] : memref<4x4xf32, #tpu.memory_space<smem>>
    %8 = vector.broadcast %7 : f32 to vector<8x128xf32>
    %9 = arith.mulf %6, %8 : vector<8x128xf32>
    %10 = arith.addf %4, %9 : vector<8x128xf32>
    %c0_8 = arith.constant 0 : index
    %c0_9 = arith.constant 0 : index
    %c0_10 = arith.constant 0 : index
    %11 = vector.load %arg6[%c0_8, %c0_9, %c0_10] : memref<1x8x128xf32, #tpu.memory_space<vmem>>, vector<1x8x128xf32>
    %12 = vector.shape_cast %11 : vector<1x8x128xf32> to vector<8x128xf32>
    %c0_11 = arith.constant 0 : index
    %c2 = arith.constant 2 : index
    %13 = memref.load %arg3[%c0_11, %c2] : memref<4x4xf32, #tpu.memory_space<smem>>
    %14 = vector.broadcast %13 : f32 to vector<8x128xf32>
    %15 = arith.mulf %12, %14 : vector<8x128xf32>
    %16 = arith.addf %10, %15 : vector<8x128xf32>
    %c0_12 = arith.constant 0 : index
    %c0_13 = arith.constant 0 : index
    %c0_14 = arith.constant 0 : index
    %17 = vector.load %arg7[%c0_12, %c0_13, %c0_14] : memref<1x8x128xf32, #tpu.memory_space<vmem>>, vector<1x8x128xf32>
    %18 = vector.shape_cast %17 : vector<1x8x128xf32> to vector<8x128xf32>
    %c0_15 = arith.constant 0 : index
    %c3 = arith.constant 3 : index
    %19 = memref.load %arg3[%c0_15, %c3] : memref<4x4xf32, #tpu.memory_space<smem>>
    %20 = vector.broadcast %19 : f32 to vector<8x128xf32>
    %21 = arith.mulf %18, %20 : vector<8x128xf32>
    %22 = arith.addf %16, %21 : vector<8x128xf32>
    %c0_16 = arith.constant 0 : index
    %c0_17 = arith.constant 0 : index
    %c0_18 = arith.constant 0 : index
    %c0_19 = arith.constant 0 : index
    %23 = vector.load %arg8[%c0_16, %c0_17, %c0_18, %c0_19] : memref<1x4x8x128xf32, #tpu.memory_space<vmem>>, vector<1x1x8x128xf32>
    %24 = vector.shape_cast %23 : vector<1x1x8x128xf32> to vector<8x128xf32>
    %25 = vector.shape_cast %22 : vector<8x128xf32> to vector<1x1x8x128xf32>
    tpu.vector_store %arg8[%c0_16, %c0_17, %c0_18, %c0_19], %25 {strides = array<i32>} : memref<1x4x8x128xf32, #tpu.memory_space<vmem>>, vector<1x1x8x128xf32>,
    %c0_20 = arith.constant 0 : index
    %c0_21 = arith.constant 0 : index
    %c0_22 = arith.constant 0 : index
    %26 = vector.load %arg4[%c0_20, %c0_21, %c0_22] : memref<1x8x128xf32, #tpu.memory_space<vmem>>, vector<1x8x128xf32>
    %27 = vector.shape_cast %26 : vector<1x8x128xf32> to vector<8x128xf32>
    %c1_23 = arith.constant 1 : index
    %c0_24 = arith.constant 0 : index
    %28 = memref.load %arg3[%c1_23, %c0_24] : memref<4x4xf32, #tpu.memory_space<smem>>
    %29 = vector.broadcast %28 : f32 to vector<8x128xf32>
    %30 = arith.mulf %27, %29 : vector<8x128xf32>
    %c0_25 = arith.constant 0 : index
    %c0_26 = arith.constant 0 : index
    %c0_27 = arith.constant 0 : index
    %31 = vector.load %arg5[%c0_25, %c0_26, %c0_27] : memref<1x8x128xf32, #tpu.memory_space<vmem>>, vector<1x8x128xf32>
    %32 = vector.shape_cast %31 : vector<1x8x128xf32> to vector<8x128xf32>
    %c1_28 = arith.constant 1 : index
    %c1_29 = arith.constant 1 : index
    %33 = memref.load %arg3[%c1_28, %c1_29] : memref<4x4xf32, #tpu.memory_space<smem>>
    %34 = vector.broadcast %33 : f32 to vector<8x128xf32>
    %35 = arith.mulf %32, %34 : vector<8x128xf32>
    %36 = arith.addf %30, %35 : vector<8x128xf32>
    %c0_30 = arith.constant 0 : index
    %c0_31 = arith.constant 0 : index
    %c0_32 = arith.constant 0 : index
    %37 = vector.load %arg6[%c0_30, %c0_31, %c0_32] : memref<1x8x128xf32, #tpu.memory_space<vmem>>, vector<1x8x128xf32>
    %38 = vector.shape_cast %37 : vector<1x8x128xf32> to vector<8x128xf32>
    %c1_33 = arith.constant 1 : index
    %c2_34 = arith.constant 2 : index
    %39 = memref.load %arg3[%c1_33, %c2_34] : memref<4x4xf32, #tpu.memory_space<smem>>
    %40 = vector.broadcast %39 : f32 to vector<8x128xf32>
    %41 = arith.mulf %38, %40 : vector<8x128xf32>
    %42 = arith.addf %36, %41 : vector<8x128xf32>
    %c0_35 = arith.constant 0 : index
    %c0_36 = arith.constant 0 : index
    %c0_37 = arith.constant 0 : index
    %43 = vector.load %arg7[%c0_35, %c0_36, %c0_37] : memref<1x8x128xf32, #tpu.memory_space<vmem>>, vector<1x8x128xf32>
    %44 = vector.shape_cast %43 : vector<1x8x128xf32> to vector<8x128xf32>
    %c1_38 = arith.constant 1 : index
    %c3_39 = arith.constant 3 : index
    %45 = memref.load %arg3[%c1_38, %c3_39] : memref<4x4xf32, #tpu.memory_space<smem>>
    %46 = vector.broadcast %45 : f32 to vector<8x128xf32>
    %47 = arith.mulf %44, %46 : vector<8x128xf32>
    %48 = arith.addf %42, %47 : vector<8x128xf32>
    %c0_40 = arith.constant 0 : index
    %c1_41 = arith.constant 1 : index
    %c0_42 = arith.constant 0 : index
    %c0_43 = arith.constant 0 : index
    %49 = vector.load %arg8[%c0_40, %c1_41, %c0_42, %c0_43] : memref<1x4x8x128xf32, #tpu.memory_space<vmem>>, vector<1x1x8x128xf32>
    %50 = vector.shape_cast %49 : vector<1x1x8x128xf32> to vector<8x128xf32>
    %51 = vector.shape_cast %48 : vector<8x128xf32> to vector<1x1x8x128xf32>
    tpu.vector_store %arg8[%c0_40, %c1_41, %c0_42, %c0_43], %51 {strides = array<i32>} : memref<1x4x8x128xf32, #tpu.memory_space<vmem>>, vector<1x1x8x128xf32>,
    %c0_44 = arith.constant 0 : index
    %c0_45 = arith.constant 0 : index
    %c0_46 = arith.constant 0 : index
    %52 = vector.load %arg4[%c0_44, %c0_45, %c0_46] : memref<1x8x128xf32, #tpu.memory_space<vmem>>, vector<1x8x128xf32>
    %53 = vector.shape_cast %52 : vector<1x8x128xf32> to vector<8x128xf32>
    %c2_47 = arith.constant 2 : index
    %c0_48 = arith.constant 0 : index
    %54 = memref.load %arg3[%c2_47, %c0_48] : memref<4x4xf32, #tpu.memory_space<smem>>
    %55 = vector.broadcast %54 : f32 to vector<8x128xf32>
    %56 = arith.mulf %53, %55 : vector<8x128xf32>
    %c0_49 = arith.constant 0 : index
    %c0_50 = arith.constant 0 : index
    %c0_51 = arith.constant 0 : index
    %57 = vector.load %arg5[%c0_49, %c0_50, %c0_51] : memref<1x8x128xf32, #tpu.memory_space<vmem>>, vector<1x8x128xf32>
    %58 = vector.shape_cast %57 : vector<1x8x128xf32> to vector<8x128xf32>
    %c2_52 = arith.constant 2 : index
    %c1_53 = arith.constant 1 : index
    %59 = memref.load %arg3[%c2_52, %c1_53] : memref<4x4xf32, #tpu.memory_space<smem>>
    %60 = vector.broadcast %59 : f32 to vector<8x128xf32>
    %61 = arith.mulf %58, %60 : vector<8x128xf32>
    %62 = arith.addf %56, %61 : vector<8x128xf32>
    %c0_54 = arith.constant 0 : index
    %c0_55 = arith.constant 0 : index
    %c0_56 = arith.constant 0 : index
    %63 = vector.load %arg6[%c0_54, %c0_55, %c0_56] : memref<1x8x128xf32, #tpu.memory_space<vmem>>, vector<1x8x128xf32>
    %64 = vector.shape_cast %63 : vector<1x8x128xf32> to vector<8x128xf32>
    %c2_57 = arith.constant 2 : index
    %c2_58 = arith.constant 2 : index
    %65 = memref.load %arg3[%c2_57, %c2_58] : memref<4x4xf32, #tpu.memory_space<smem>>
    %66 = vector.broadcast %65 : f32 to vector<8x128xf32>
    %67 = arith.mulf %64, %66 : vector<8x128xf32>
    %68 = arith.addf %62, %67 : vector<8x128xf32>
    %c0_59 = arith.constant 0 : index
    %c0_60 = arith.constant 0 : index
    %c0_61 = arith.constant 0 : index
    %69 = vector.load %arg7[%c0_59, %c0_60, %c0_61] : memref<1x8x128xf32, #tpu.memory_space<vmem>>, vector<1x8x128xf32>
    %70 = vector.shape_cast %69 : vector<1x8x128xf32> to vector<8x128xf32>
    %c2_62 = arith.constant 2 : index
    %c3_63 = arith.constant 3 : index
    %71 = memref.load %arg3[%c2_62, %c3_63] : memref<4x4xf32, #tpu.memory_space<smem>>
    %72 = vector.broadcast %71 : f32 to vector<8x128xf32>
    %73 = arith.mulf %70, %72 : vector<8x128xf32>
    %74 = arith.addf %68, %73 : vector<8x128xf32>
    %c0_64 = arith.constant 0 : index
    %c2_65 = arith.constant 2 : index
    %c0_66 = arith.constant 0 : index
    %c0_67 = arith.constant 0 : index
    %75 = vector.load %arg8[%c0_64, %c2_65, %c0_66, %c0_67] : memref<1x4x8x128xf32, #tpu.memory_space<vmem>>, vector<1x1x8x128xf32>
    %76 = vector.shape_cast %75 : vector<1x1x8x128xf32> to vector<8x128xf32>
    %77 = vector.shape_cast %74 : vector<8x128xf32> to vector<1x1x8x128xf32>
    tpu.vector_store %arg8[%c0_64, %c2_65, %c0_66, %c0_67], %77 {strides = array<i32>} : memref<1x4x8x128xf32, #tpu.memory_space<vmem>>, vector<1x1x8x128xf32>,
    %c0_68 = arith.constant 0 : index
    %c0_69 = arith.constant 0 : index
    %c0_70 = arith.constant 0 : index
    %78 = vector.load %arg4[%c0_68, %c0_69, %c0_70] : memref<1x8x128xf32, #tpu.memory_space<vmem>>, vector<1x8x128xf32>
    %79 = vector.shape_cast %78 : vector<1x8x128xf32> to vector<8x128xf32>
    %c3_71 = arith.constant 3 : index
    %c0_72 = arith.constant 0 : index
    %80 = memref.load %arg3[%c3_71, %c0_72] : memref<4x4xf32, #tpu.memory_space<smem>>
    %81 = vector.broadcast %80 : f32 to vector<8x128xf32>
    %82 = arith.mulf %79, %81 : vector<8x128xf32>
    %c0_73 = arith.constant 0 : index
    %c0_74 = arith.constant 0 : index
    %c0_75 = arith.constant 0 : index
    %83 = vector.load %arg5[%c0_73, %c0_74, %c0_75] : memref<1x8x128xf32, #tpu.memory_space<vmem>>, vector<1x8x128xf32>
    %84 = vector.shape_cast %83 : vector<1x8x128xf32> to vector<8x128xf32>
    %c3_76 = arith.constant 3 : index
    %c1_77 = arith.constant 1 : index
    %85 = memref.load %arg3[%c3_76, %c1_77] : memref<4x4xf32, #tpu.memory_space<smem>>
    %86 = vector.broadcast %85 : f32 to vector<8x128xf32>
    %87 = arith.mulf %84, %86 : vector<8x128xf32>
    %88 = arith.addf %82, %87 : vector<8x128xf32>
    %c0_78 = arith.constant 0 : index
    %c0_79 = arith.constant 0 : index
    %c0_80 = arith.constant 0 : index
    %89 = vector.load %arg6[%c0_78, %c0_79, %c0_80] : memref<1x8x128xf32, #tpu.memory_space<vmem>>, vector<1x8x128xf32>
    %90 = vector.shape_cast %89 : vector<1x8x128xf32> to vector<8x128xf32>
    %c3_81 = arith.constant 3 : index
    %c2_82 = arith.constant 2 : index
    %91 = memref.load %arg3[%c3_81, %c2_82] : memref<4x4xf32, #tpu.memory_space<smem>>
    %92 = vector.broadcast %91 : f32 to vector<8x128xf32>
    %93 = arith.mulf %90, %92 : vector<8x128xf32>
    %94 = arith.addf %88, %93 : vector<8x128xf32>
    %c0_83 = arith.constant 0 : index
    %c0_84 = arith.constant 0 : index
    %c0_85 = arith.constant 0 : index
    %95 = vector.load %arg7[%c0_83, %c0_84, %c0_85] : memref<1x8x128xf32, #tpu.memory_space<vmem>>, vector<1x8x128xf32>
    %96 = vector.shape_cast %95 : vector<1x8x128xf32> to vector<8x128xf32>
    %c3_86 = arith.constant 3 : index
    %c3_87 = arith.constant 3 : index
    %97 = memref.load %arg3[%c3_86, %c3_87] : memref<4x4xf32, #tpu.memory_space<smem>>
    %98 = vector.broadcast %97 : f32 to vector<8x128xf32>
    %99 = arith.mulf %96, %98 : vector<8x128xf32>
    %100 = arith.addf %94, %99 : vector<8x128xf32>
    %c0_88 = arith.constant 0 : index
    %c3_89 = arith.constant 3 : index
    %c0_90 = arith.constant 0 : index
    %c0_91 = arith.constant 0 : index
    %101 = vector.load %arg8[%c0_88, %c3_89, %c0_90, %c0_91] : memref<1x4x8x128xf32, #tpu.memory_space<vmem>>, vector<1x1x8x128xf32>
    %102 = vector.shape_cast %101 : vector<1x1x8x128xf32> to vector<8x128xf32>
    %103 = vector.shape_cast %100 : vector<8x128xf32> to vector<1x1x8x128xf32>
    tpu.vector_store %arg8[%c0_88, %c3_89, %c0_90, %c0_91], %103 {strides = array<i32>} : memref<1x4x8x128xf32, #tpu.memory_space<vmem>>, vector<1x1x8x128xf32>,
    return
  }
  func.func @transform_0(%arg0: i32, %arg1: i32, %arg2: i32) -> (i32, i32) {
    %c0_i32 = arith.constant 0 : i32
    %c0_i32_0 = arith.constant 0 : i32
    %c0_i32_1 = arith.constant 0 : i32
    return %c0_i32, %c0_i32_0 : i32, i32
  }
  func.func @transform_1(%arg0: i32, %arg1: i32, %arg2: i32) -> (i32, i32, i32) {
    %c0_i32 = arith.constant 0 : i32
    return %arg0, %arg1, %arg2 : i32, i32, i32
  }
  func.func @transform_2(%arg0: i32, %arg1: i32, %arg2: i32) -> (i32, i32, i32) {
    %c0_i32 = arith.constant 0 : i32
    return %arg0, %arg1, %arg2 : i32, i32, i32
  }
  func.func @transform_3(%arg0: i32, %arg1: i32, %arg2: i32) -> (i32, i32, i32) {
    %c0_i32 = arith.constant 0 : i32
    return %arg0, %arg1, %arg2 : i32, i32, i32
  }
  func.func @transform_4(%arg0: i32, %arg1: i32, %arg2: i32) -> (i32, i32, i32) {
    %c0_i32 = arith.constant 0 : i32
    return %arg0, %arg1, %arg2 : i32, i32, i32
  }
  func.func @transform_5(%arg0: i32, %arg1: i32, %arg2: i32) -> (i32, i32, i32, i32) {
    %c0_i32 = arith.constant 0 : i32
    %c0_i32_0 = arith.constant 0 : i32
    return %arg0, %c0_i32, %arg1, %arg2 : i32, i32, i32, i32
  }
}

</mosaic_0001>

<llo_original>
// kernel: tpu_custom_call.1
$region0: #{tpu_custom_call.1}
  #allocation0 [shape = 'u32[]', space=smem, size = 0x4, offset = 0x4, fixed_abs, tag = 'smem constant byte address 0x4 - core index']
  #allocation1 [shape = 'u32[72,128]{1,0:T(1,128)}', space=vmem, size = 0x9000, scoped, tag = 'internal scratch']
  %s0 = inlined_call_operand.hbm [shape: f32[4,4], index: 0, kind: input, shape index: {}]
  %s1 = inlined_call_operand.hbm [shape: f32[2,16,256], index: 1, kind: input, shape index: {}]
  %s2 = inlined_call_operand.hbm [shape: f32[2,16,256], index: 2, kind: input, shape index: {}]
  %s3 = inlined_call_operand.hbm [shape: f32[2,16,256], index: 3, kind: input, shape index: {}]
  %s4 = inlined_call_operand.hbm [shape: f32[2,16,256], index: 4, kind: input, shape index: {}]
  %s5 = inlined_call_operand.hbm [shape: f32[2,4,16,256], index: 5, kind: output, shape index: {}]
  %s6 = sld [smem:[#allocation0]]
  $region73: #{tpu_custom_call.1} parent=0
    _
  %s8 = ssub.s32 1, %s6
  %s9 = scalar_select 0, %s8, %s6
  $region1: #{tpu_custom_call.1} parent=0
    #allocation2 [shape = 'u8[2048]{0}', space=smem, size = 0x800, scoped, tag = 'input window, operand 0, single buffered']
    #allocation3 [shape = 's32[2]{0}', space=sflag, size = 0x8, scoped, tag = 'scoped memory for tpu_custom_call.1']
    #allocation4 [shape = 's32[2]{0}', space=sflag, size = 0x8, scoped, tag = 'scoped memory for tpu_custom_call.1']
    #allocation5 [shape = 's32[2]{0}', space=sflag, size = 0x8, scoped, tag = 'scoped memory for tpu_custom_call.1']
    #allocation6 [shape = 'u8[8192]{0}', space=vmem, size = 0x2000, scoped, tag = 'input window, operand 1']
    #allocation7 [shape = 'u8[8192]{0}', space=vmem, size = 0x2000, scoped, tag = 'input window, operand 2']
    #allocation8 [shape = 's32[2]{0}', space=sflag, size = 0x8, scoped, tag = 'scoped memory for tpu_custom_call.1']
    #allocation9 [shape = 'u8[8192]{0}', space=vmem, size = 0x2000, scoped, tag = 'input window, operand 3']
    #allocation10 [shape = 'u8[8192]{0}', space=vmem, size = 0x2000, scoped, tag = 'input window, operand 4']
    #allocation11 [shape = 's32[2]{0}', space=sflag, size = 0x8, scoped, tag = 'scoped memory for tpu_custom_call.1']
    #allocation12 [shape = 'u8[32768]{0}', space=vmem, size = 0x8000, scoped, tag = 'output window, operand 0']
    %10 = vsyncpa [#allocation5], 0
    %11 = vsyncpa [#allocation3], 0
    %s12 = scalar_lea.sflag [#allocation3], 1
    %13 = vsyncpa %s12, 0
    %14 = vsyncpa [#allocation8], 0
    %s15 = scalar_lea.sflag [#allocation8], 1
    %16 = vsyncpa %s15, 0
    %17 = vsyncpa [#allocation11], 0
    %s18 = scalar_lea.sflag [#allocation11], 1
    %19 = vsyncpa %s18, 0
    %20 = vsyncpa [#allocation4], 0
    %s21 = scalar_lea.sflag [#allocation4], 1
    %22 = vsyncpa %s21, 0
    loop: start=0, step=1, limit=10
    $region2: #{tpu_custom_call.1} parent=1 // loop_pre_header
      _
    $region3: #{tpu_custom_call.1} parent=1 // loop_header
      %s24 = sphi 0, %s28
      %p25 = scmp.ge.s32.totalorder %s24, 10
      %s31 = sphi 0, %s50
      %s32 = sphi 0, %s46
      %s33 = sphi 0, %s42
      %s34 = sphi 0, %s31
      %s35 = sphi 0, %s32
      %s36 = sphi 0, %s33
      %s37 = sphi 0, %s34
      %s38 = sphi 0, %s35
      %s39 = sphi 0, %s36
      %s51 = sphi 0, %s51
      %s53 = sphi 0, %s51
      %s54 = sphi 0, %s53
      %s68 = sphi 0, %s54
      %s78 = sphi 0, %s80
      %s81 = sphi 0, %s78
      %s82 = sphi 0, %s81
      %s98 = sphi 0, %s82
      %s108 = sphi 0, %s110
      %s111 = sphi 0, %s108
      %s112 = sphi 0, %s111
      %s128 = sphi 0, %s112
      %s138 = sphi 0, %s140
      %s141 = sphi 0, %s138
      %s142 = sphi 0, %s141
      %s158 = sphi 0, %s142
      %s168 = sphi 0, %s170
      %s171 = sphi 0, %s168
      %s172 = sphi 0, %s171
      %s188 = sphi 0, %s172
      %s198 = sphi 0, %s200
      %s201 = sphi 0, %s198
      %s202 = sphi 0, %s201
      %s218 = sphi 0, %s202
    $region4: #{tpu_custom_call.1} parent=1 // loop_header_branch
      %27 = sbr.rel (%p25) target = $region8
    $region5: #{tpu_custom_call.1} parent=1 // loop_body
      %s29 = ssub.s32 %s24, 1
      %s30 = ssub.s32 %s24, 2
      %s40 = sadd.s32 1, %s33
      %p41 = scmp.ge.s32.totalorder %s40, 2
      %s42 = scalar_select %p41, 0, %s40
      %s43 = sadd.s32 1, %s32
      %s44 = scalar_select %p41, %s43, %s32
      %p45 = scmp.ge.s32.totalorder %s44, 2
      %s46 = scalar_select %p45, 0, %s44
      %s47 = sadd.s32 1, %s31
      %s48 = scalar_select %p45, %s47, %s31
      %p49 = scmp.ge.s32.totalorder %s48, 2
      %s50 = scalar_select %p49, 0, %s48
      %s52 = sadd.s32 %s51, 1
      %p55 = scmp.eq.s32.totalorder %s24, 7
      %p56 = scmp.ne.s32.totalorder %s51, %s53
      %p57 = scmp.eq.s32.totalorder %s24, 0
      %p58 = por %p56, %p57
      %p59 = scmp.ne.s32.totalorder %s51, %s53
      %p60 = scmp.eq.s32.totalorder %s29, 7
      %p61 = por %p59, %p60
      %p62 = scmp.ne.s32.totalorder %s53, %s54
      %p63 = scmp.eq.s32.totalorder %s29, 0
      %p64 = por %p62, %p63
      %p65 = scmp.ne.s32.totalorder %s53, %s54
      %p66 = scmp.eq.s32.totalorder %s30, 7
      %p67 = por %p65, %p66
      %p69 = scmp.ne.s32.totalorder %s54, %s68
      %p70 = scmp.eq.s32.totalorder %s30, 0
      %p71 = por %p69, %p70
      %s72 = ssub.s32 %s31, %s50
      %s73 = ssub.s32 %s32, %s46
      %s74 = sor.u32 %s72, %s73
      %s75 = ssub.s32 %s33, %s42
      %s76 = sor.u32 %s74, %s75
      %p77 = scmp.eq.s32.totalorder %s76, 0
      %s79 = sadd.s32 %s78, 1
      %s80 = scalar_select %p77, %s78, %s79
      %p83 = pneg %p77
      %p84 = scmp.eq.s32.totalorder %s24, 7
      %p85 = por %p83, %p84
      %p86 = scmp.ne.s32.totalorder %s78, %s81
      %p87 = scmp.eq.s32.totalorder %s24, 0
      %p88 = por %p86, %p87
      %p89 = scmp.ne.s32.totalorder %s78, %s81
      %p90 = scmp.eq.s32.totalorder %s29, 7
      %p91 = por %p89, %p90
      %p92 = scmp.ne.s32.totalorder %s81, %s82
      %p93 = scmp.eq.s32.totalorder %s29, 0
      %p94 = por %p92, %p93
      %p95 = scmp.ne.s32.totalorder %s81, %s82
      %p96 = scmp.eq.s32.totalorder %s30, 7
      %p97 = por %p95, %p96
      %p99 = scmp.ne.s32.totalorder %s82, %s98
      %p100 = scmp.eq.s32.totalorder %s30, 0
      %p101 = por %p99, %p100
      %s102 = ssub.s32 %s31, %s50
      %s103 = ssub.s32 %s32, %s46
      %s104 = sor.u32 %s102, %s103
      %s105 = ssub.s32 %s33, %s42
      %s106 = sor.u32 %s104, %s105
      %p107 = scmp.eq.s32.totalorder %s106, 0
      %s109 = sadd.s32 %s108, 1
      %s110 = scalar_select %p107, %s108, %s109
      %p113 = pneg %p107
      %p114 = scmp.eq.s32.totalorder %s24, 7
      %p115 = por %p113, %p114
      %p116 = scmp.ne.s32.totalorder %s108, %s111
      %p117 = scmp.eq.s32.totalorder %s24, 0
      %p118 = por %p116, %p117
      %p119 = scmp.ne.s32.totalorder %s108, %s111
      %p120 = scmp.eq.s32.totalorder %s29, 7
      %p121 = por %p119, %p120
      %p122 = scmp.ne.s32.totalorder %s111, %s112
      %p123 = scmp.eq.s32.totalorder %s29, 0
      %p124 = por %p122, %p123
      %p125 = scmp.ne.s32.totalorder %s111, %s112
      %p126 = scmp.eq.s32.totalorder %s30, 7
      %p127 = por %p125, %p126
      %p129 = scmp.ne.s32.totalorder %s112, %s128
      %p130 = scmp.eq.s32.totalorder %s30, 0
      %p131 = por %p129, %p130
      %s132 = ssub.s32 %s31, %s50
      %s133 = ssub.s32 %s32, %s46
      %s134 = sor.u32 %s132, %s133
      %s135 = ssub.s32 %s33, %s42
      %s136 = sor.u32 %s134, %s135
      %p137 = scmp.eq.s32.totalorder %s136, 0
      %s139 = sadd.s32 %s138, 1
      %s140 = scalar_select %p137, %s138, %s139
      %p143 = pneg %p137
      %p144 = scmp.eq.s32.totalorder %s24, 7
      %p145 = por %p143, %p144
      %p146 = scmp.ne.s32.totalorder %s138, %s141
      %p147 = scmp.eq.s32.totalorder %s24, 0
      %p148 = por %p146, %p147
      %p149 = scmp.ne.s32.totalorder %s138, %s141
      %p150 = scmp.eq.s32.totalorder %s29, 7
      %p151 = por %p149, %p150
      %p152 = scmp.ne.s32.totalorder %s141, %s142
      %p153 = scmp.eq.s32.totalorder %s29, 0
      %p154 = por %p152, %p153
      %p155 = scmp.ne.s32.totalorder %s141, %s142
      %p156 = scmp.eq.s32.totalorder %s30, 7
      %p157 = por %p155, %p156
      %p159 = scmp.ne.s32.totalorder %s142, %s158
      %p160 = scmp.eq.s32.totalorder %s30, 0
      %p161 = por %p159, %p160
      %s162 = ssub.s32 %s31, %s50
      %s163 = ssub.s32 %s32, %s46
      %s164 = sor.u32 %s162, %s163
      %s165 = ssub.s32 %s33, %s42
      %s166 = sor.u32 %s164, %s165
      %p167 = scmp.eq.s32.totalorder %s166, 0
      %s169 = sadd.s32 %s168, 1
      %s170 = scalar_select %p167, %s168, %s169
      %p173 = pneg %p167
      %p174 = scmp.eq.s32.totalorder %s24, 7
      %p175 = por %p173, %p174
      %p176 = scmp.ne.s32.totalorder %s168, %s171
      %p177 = scmp.eq.s32.totalorder %s24, 0
      %p178 = por %p176, %p177
      %p179 = scmp.ne.s32.totalorder %s168, %s171
      %p180 = scmp.eq.s32.totalorder %s29, 7
      %p181 = por %p179, %p180
      %p182 = scmp.ne.s32.totalorder %s171, %s172
      %p183 = scmp.eq.s32.totalorder %s29, 0
      %p184 = por %p182, %p183
      %p185 = scmp.ne.s32.totalorder %s171, %s172
      %p186 = scmp.eq.s32.totalorder %s30, 7
      %p187 = por %p185, %p186
      %p189 = scmp.ne.s32.totalorder %s172, %s188
      %p190 = scmp.eq.s32.totalorder %s30, 0
      %p191 = por %p189, %p190
      %s192 = ssub.s32 %s31, %s50
      %s193 = ssub.s32 %s32, %s46
      %s194 = sor.u32 %s192, %s193
      %s195 = ssub.s32 %s33, %s42
      %s196 = sor.u32 %s194, %s195
      %p197 = scmp.eq.s32.totalorder %s196, 0
      %s199 = sadd.s32 %s198, 1
      %s200 = scalar_select %p197, %s198, %s199
      %p203 = pneg %p197
      %p204 = scmp.eq.s32.totalorder %s24, 7
      %p205 = por %p203, %p204
      %p206 = scmp.ne.s32.totalorder %s198, %s201
      %p207 = scmp.eq.s32.totalorder %s24, 0
      %p208 = por %p206, %p207
      %p209 = scmp.ne.s32.totalorder %s198, %s201
      %p210 = scmp.eq.s32.totalorder %s29, 7
      %p211 = por %p209, %p210
      %p212 = scmp.ne.s32.totalorder %s201, %s202
      %p213 = scmp.eq.s32.totalorder %s29, 0
      %p214 = por %p212, %p213
      %p215 = scmp.ne.s32.totalorder %s201, %s202
      %p216 = scmp.eq.s32.totalorder %s30, 7
      %p217 = por %p215, %p216
      %p219 = scmp.ne.s32.totalorder %s202, %s218
      %p220 = scmp.eq.s32.totalorder %s30, 0
      %p221 = por %p219, %p220
      %p222 = scmp.le.s32.totalorder 1, %s24
      %p223 = scmp.lt.s32.totalorder %s24, 9
      %p224 = pnand %p222, %p223
      %p225 = pneg %p224
      // Predicated region
      $region9: #{tpu_custom_call.1} parent=5 // pred_check
        _
      $region10: #{tpu_custom_call.1} parent=5 // pred_check_branch
        %227 = sbr.rel (%p224) target = $region12
      $region11: #{tpu_custom_call.1} parent=5 // pred_region
        %s228 = ssub.s32 %s24, 1
        // Predicated region
        $region13: #{tpu_custom_call.1} parent=11 // pred_check
          %p229 = pneg %p64
        $region14: #{tpu_custom_call.1} parent=11 // pred_check_branch
          %231 = sbr.rel (%p229) target = $region16
        $region15: #{tpu_custom_call.1} parent=11 // pred_region
          %233 = vsyncadd [#allocation5], 0
          %s235 = sshll.u32 %s0, 4
          %s236 = int_to_ptr.hbm [resolvable:$true] %s235
          %238 = dma.hbm_to_smem %s236, 64, [#allocation2], [#allocation5]
        $region16: #{tpu_custom_call.1} parent=11 // pred_fallthru
          _
      $region12: #{tpu_custom_call.1} parent=5 // pred_fallthru
        _
      %p239 = scmp.lt.s32.totalorder %s24, 8
      // Predicated region
      $region17: #{tpu_custom_call.1} parent=5 // pred_check
        %p240 = pneg %p239
      $region18: #{tpu_custom_call.1} parent=5 // pred_check_branch
        %242 = sbr.rel (%p240) target = $region20
      $region19: #{tpu_custom_call.1} parent=5 // pred_region
        // Predicated region
        $region21: #{tpu_custom_call.1} parent=19 // pred_check
          %p243 = pneg %p88
        $region22: #{tpu_custom_call.1} parent=19 // pred_check_branch
          %245 = sbr.rel (%p243) target = $region24
        $region23: #{tpu_custom_call.1} parent=19 // pred_region
          %s246 = sand.u32 %s78, 1
          %s247 = scalar_lea.sflag [#allocation3], %s246
          %s248 = sand.u32 %s78, 1
          %s249 = smul.addr %s248, 8
          %s250 = scalar_lea.vmem [#allocation6], %s249
          %252 = vsyncadd %s247, 0
          %s253 = smul.addr %s32, 2
          %s254 = sadd.s32 %s33, %s253
          %s255 = smul.addr %s31, 4
          %s256 = sadd.s32 %s254, %s255
          %s257 = smul.addr %s256, 8
          %s258 = scalar_lea.hbm %s1, %s257
          %s260 = sshll.u32 %s258, 4
          %s261 = int_to_ptr.hbm [resolvable:$true] %s260
          %s262 = sshll.u32 %s250, 4
          %s263 = int_to_ptr.vmem [resolvable:$true] %s262
          %265 = dma.hbm_to_vmem [thread:$0]  %s261, 128, %s263, %s247
        $region24: #{tpu_custom_call.1} parent=19 // pred_fallthru
          _
        // Predicated region
        $region25: #{tpu_custom_call.1} parent=19 // pred_check
          %p266 = pneg %p118
        $region26: #{tpu_custom_call.1} parent=19 // pred_check_branch
          %268 = sbr.rel (%p266) target = $region28
        $region27: #{tpu_custom_call.1} parent=19 // pred_region
          %s269 = sand.u32 %s24, 1
          %s270 = scalar_lea.sflag [#allocation8], %s269
          %s271 = sand.u32 %s108, 1
          %s272 = smul.addr %s271, 8
          %s273 = scalar_lea.vmem [#allocation7], %s272
          %275 = vsyncadd %s270, 0
          %s276 = smul.addr %s32, 2
          %s277 = sadd.s32 %s33, %s276
          %s278 = smul.addr %s31, 4
          %s279 = sadd.s32 %s277, %s278
          %s280 = smul.addr %s279, 8
          %s281 = scalar_lea.hbm %s2, %s280
          %s283 = sshll.u32 %s281, 4
          %s284 = int_to_ptr.hbm [resolvable:$true] %s283
          %s285 = sshll.u32 %s273, 4
          %s286 = int_to_ptr.vmem [resolvable:$true] %s285
          %288 = dma.hbm_to_vmem [thread:$0]  %s284, 128, %s286, %s270
        $region28: #{tpu_custom_call.1} parent=19 // pred_fallthru
          _
        // Predicated region
        $region29: #{tpu_custom_call.1} parent=19 // pred_check
          %p289 = pneg %p148
        $region30: #{tpu_custom_call.1} parent=19 // pred_check_branch
          %291 = sbr.rel (%p289) target = $region32
        $region31: #{tpu_custom_call.1} parent=19 // pred_region
          %s292 = sand.u32 %s24, 1
          %s293 = scalar_lea.sflag [#allocation8], %s292
          %s294 = sand.u32 %s138, 1
          %s295 = smul.addr %s294, 8
          %s296 = scalar_lea.vmem [#allocation9], %s295
          %298 = vsyncadd %s293, 0
          %s299 = smul.addr %s32, 2
          %s300 = sadd.s32 %s33, %s299
          %s301 = smul.addr %s31, 4
          %s302 = sadd.s32 %s300, %s301
          %s303 = smul.addr %s302, 8
          %s304 = scalar_lea.hbm %s3, %s303
          %s306 = sshll.u32 %s304, 4
          %s307 = int_to_ptr.hbm [resolvable:$true] %s306
          %s308 = sshll.u32 %s296, 4
          %s309 = int_to_ptr.vmem [resolvable:$true] %s308
          %311 = dma.hbm_to_vmem [thread:$0]  %s307, 128, %s309, %s293
        $region32: #{tpu_custom_call.1} parent=19 // pred_fallthru
          _
        // Predicated region
        $region33: #{tpu_custom_call.1} parent=19 // pred_check
          %p312 = pneg %p178
        $region34: #{tpu_custom_call.1} parent=19 // pred_check_branch
          %314 = sbr.rel (%p312) target = $region36
        $region35: #{tpu_custom_call.1} parent=19 // pred_region
          %s315 = sand.u32 %s168, 1
          %s316 = scalar_lea.sflag [#allocation11], %s315
          %s317 = sand.u32 %s168, 1
          %s318 = smul.addr %s317, 8
          %s319 = scalar_lea.vmem [#allocation10], %s318
          %321 = vsyncadd %s316, 0
          %s322 = smul.addr %s32, 2
          %s323 = sadd.s32 %s33, %s322
          %s324 = smul.addr %s31, 4
          %s325 = sadd.s32 %s323, %s324
          %s326 = smul.addr %s325, 8
          %s327 = scalar_lea.hbm %s4, %s326
          %s329 = sshll.u32 %s327, 4
          %s330 = int_to_ptr.hbm [resolvable:$true] %s329
          %s331 = sshll.u32 %s319, 4
          %s332 = int_to_ptr.vmem [resolvable:$true] %s331
          %334 = dma.hbm_to_vmem [thread:$0]  %s330, 128, %s332, %s316
        $region36: #{tpu_custom_call.1} parent=19 // pred_fallthru
          _
      $region20: #{tpu_custom_call.1} parent=5 // pred_fallthru
        _
      %p335 = scmp.le.s32.totalorder 1, %s24
      %p336 = scmp.lt.s32.totalorder %s24, 9
      %p337 = pnand %p335, %p336
      %p338 = pneg %p337
      // Predicated region
      $region37: #{tpu_custom_call.1} parent=5 // pred_check
        _
      $region38: #{tpu_custom_call.1} parent=5 // pred_check_branch
        %340 = sbr.rel (%p337) target = $region40
      $region39: #{tpu_custom_call.1} parent=5 // pred_region
        %s341 = ssub.s32 %s24, 1
        // Predicated region
        $region41: #{tpu_custom_call.1} parent=39 // pred_check
          %p342 = pneg %p64
        $region42: #{tpu_custom_call.1} parent=39 // pred_check_branch
          %344 = sbr.rel (%p342) target = $region44
        $region43: #{tpu_custom_call.1} parent=39 // pred_region
          %346 = dma.done [#allocation5], 64
        $region44: #{tpu_custom_call.1} parent=39 // pred_fallthru
          _
        %s347 = sand.u32 %s81, 1
        %s348 = scalar_lea.sflag [#allocation3], %s347
        %s349 = sand.u32 %s81, 1
        %s350 = smul.addr %s349, 8
        %s351 = scalar_lea.vmem [#allocation6], %s350
        // Predicated region
        $region45: #{tpu_custom_call.1} parent=39 // pred_check
          %p352 = pneg %p94
        $region46: #{tpu_custom_call.1} parent=39 // pred_check_branch
          %354 = sbr.rel (%p352) target = $region48
        $region47: #{tpu_custom_call.1} parent=39 // pred_region
          %356 = dma.done %s348, 128
        $region48: #{tpu_custom_call.1} parent=39 // pred_fallthru
          _
        %s357 = sand.u32 %s29, 1
        %s358 = scalar_lea.sflag [#allocation8], %s357
        %s359 = sand.u32 %s111, 1
        %s360 = smul.addr %s359, 8
        %s361 = scalar_lea.vmem [#allocation7], %s360
        // Predicated region
        $region49: #{tpu_custom_call.1} parent=39 // pred_check
          %p362 = pneg %p124
        $region50: #{tpu_custom_call.1} parent=39 // pred_check_branch
          %364 = sbr.rel (%p362) target = $region52
        $region51: #{tpu_custom_call.1} parent=39 // pred_region
          %366 = dma.done %s358, 128
        $region52: #{tpu_custom_call.1} parent=39 // pred_fallthru
          _
        %s367 = sand.u32 %s29, 1
        %s368 = scalar_lea.sflag [#allocation8], %s367
        %s369 = sand.u32 %s141, 1
        %s370 = smul.addr %s369, 8
        %s371 = scalar_lea.vmem [#allocation9], %s370
        // Predicated region
        $region53: #{tpu_custom_call.1} parent=39 // pred_check
          %p372 = pneg %p154
        $region54: #{tpu_custom_call.1} parent=39 // pred_check_branch
          %374 = sbr.rel (%p372) target = $region56
        $region55: #{tpu_custom_call.1} parent=39 // pred_region
          %376 = dma.done %s368, 128
        $region56: #{tpu_custom_call.1} parent=39 // pred_fallthru
          _
        %s377 = sand.u32 %s171, 1
        %s378 = scalar_lea.sflag [#allocation11], %s377
        %s379 = sand.u32 %s171, 1
        %s380 = smul.addr %s379, 8
        %s381 = scalar_lea.vmem [#allocation10], %s380
        // Predicated region
        $region57: #{tpu_custom_call.1} parent=39 // pred_check
          %p382 = pneg %p184
        $region58: #{tpu_custom_call.1} parent=39 // pred_check_branch
          %384 = sbr.rel (%p382) target = $region60
        $region59: #{tpu_custom_call.1} parent=39 // pred_region
          %386 = dma.done %s378, 128
        $region60: #{tpu_custom_call.1} parent=39 // pred_fallthru
          _
        %387 = sfence
        %p388 = pneg %p64
        %p389 = pneg %p61
        %s390 = sand.u32 %s81, 1
        %s391 = scalar_lea.sflag [#allocation3], %s390
        %s392 = sand.u32 %s81, 1
        %s393 = smul.addr %s392, 8
        %s394 = scalar_lea.vmem [#allocation6], %s393
        %p395 = pneg %p94
        %p396 = pneg %p91
        %s397 = sand.u32 %s29, 1
        %s398 = scalar_lea.sflag [#allocation8], %s397
        %s399 = sand.u32 %s111, 1
        %s400 = smul.addr %s399, 8
        %s401 = scalar_lea.vmem [#allocation7], %s400
        %p402 = pneg %p124
        %p403 = pneg %p121
        %s404 = sand.u32 %s29, 1
        %s405 = scalar_lea.sflag [#allocation8], %s404
        %s406 = sand.u32 %s141, 1
        %s407 = smul.addr %s406, 8
        %s408 = scalar_lea.vmem [#allocation9], %s407
        %p409 = pneg %p154
        %p410 = pneg %p151
        %s411 = sand.u32 %s171, 1
        %s412 = scalar_lea.sflag [#allocation11], %s411
        %s413 = sand.u32 %s171, 1
        %s414 = smul.addr %s413, 8
        %s415 = scalar_lea.vmem [#allocation10], %s414
        %p416 = pneg %p184
        %p417 = pneg %p181
        %p418 = pneg %p214
        %p419 = pneg %p211
        %s420 = sand.u32 %s201, 1
        %s421 = scalar_lea.sflag [#allocation4], %s420
        %s422 = sand.u32 %s201, 1
        %s423 = smul.addr %s422, 32
        %s424 = scalar_lea.vmem [#allocation12], %s423
        %v425 = vld [vmem:[%s351] sm:$0xff]
        %s426 = sld [smem:[#allocation2]]
        %v427 = vstv %s426
        %v428 = vmul.f32 %v425, %v427
        %v429 = vld [vmem:[%s361] sm:$0xff]
        %s430 = sld [smem:[#allocation2 + $0x1]]
        %v431 = vstv %s430
        %v432 = vmul.f32 %v429, %v431
        %v433 = vadd.f32 %v428, %v432
        %v434 = vld [vmem:[%s371] sm:$0xff]
        %s435 = sld [smem:[#allocation2 + $0x2]]
        %v436 = vstv %s435
        %v437 = vmul.f32 %v434, %v436
        %v438 = vadd.f32 %v433, %v437
        %v439 = vld [vmem:[%s381] sm:$0xff]
        %s440 = sld [smem:[#allocation2 + $0x3]]
        %v441 = vstv %s440
        %v442 = vmul.f32 %v439, %v441
        %v443 = vadd.f32 %v438, %v442
        %444 = vst [vmem:[%s424] sm:$0xff] %v443
        %v445 = vld [vmem:[%s351] sm:$0xff]
        %s446 = sld [smem:[#allocation2 + $0x80]]
        %v447 = vstv %s446
        %v448 = vmul.f32 %v445, %v447
        %v449 = vld [vmem:[%s361] sm:$0xff]
        %s450 = sld [smem:[#allocation2 + $0x81]]
        %v451 = vstv %s450
        %v452 = vmul.f32 %v449, %v451
        %v453 = vadd.f32 %v448, %v452
        %v454 = vld [vmem:[%s371] sm:$0xff]
        %s455 = sld [smem:[#allocation2 + $0x82]]
        %v456 = vstv %s455
        %v457 = vmul.f32 %v454, %v456
        %v458 = vadd.f32 %v453, %v457
        %v459 = vld [vmem:[%s381] sm:$0xff]
        %s460 = sld [smem:[#allocation2 + $0x83]]
        %v461 = vstv %s460
        %v462 = vmul.f32 %v459, %v461
        %v463 = vadd.f32 %v458, %v462
        %s464 = scalar_lea.vmem %s424, 8 [#allocation12]
        %465 = vst [vmem:[%s464] sm:$0xff] %v463
        %v466 = vld [vmem:[%s351] sm:$0xff]
        %s467 = sld [smem:[#allocation2 + $0x100]]
        %v468 = vstv %s467
        %v469 = vmul.f32 %v466, %v468
        %v470 = vld [vmem:[%s361] sm:$0xff]
        %s471 = sld [smem:[#allocation2 + $0x101]]
        %v472 = vstv %s471
        %v473 = vmul.f32 %v470, %v472
        %v474 = vadd.f32 %v469, %v473
        %v475 = vld [vmem:[%s371] sm:$0xff]
        %s476 = sld [smem:[#allocation2 + $0x102]]
        %v477 = vstv %s476
        %v478 = vmul.f32 %v475, %v477
        %v479 = vadd.f32 %v474, %v478
        %v480 = vld [vmem:[%s381] sm:$0xff]
        %s481 = sld [smem:[#allocation2 + $0x103]]
        %v482 = vstv %s481
        %v483 = vmul.f32 %v480, %v482
        %v484 = vadd.f32 %v479, %v483
        %s485 = scalar_lea.vmem %s424, 16 [#allocation12]
        %486 = vst [vmem:[%s485] sm:$0xff] %v484
        %v487 = vld [vmem:[%s351] sm:$0xff]
        %s488 = sld [smem:[#allocation2 + $0x180]]
        %v489 = vstv %s488
        %v490 = vmul.f32 %v487, %v489
        %v491 = vld [vmem:[%s361] sm:$0xff]
        %s492 = sld [smem:[#allocation2 + $0x181]]
        %v493 = vstv %s492
        %v494 = vmul.f32 %v491, %v493
        %v495 = vadd.f32 %v490, %v494
        %v496 = vld [vmem:[%s371] sm:$0xff]
        %s497 = sld [smem:[#allocation2 + $0x182]]
        %v498 = vstv %s497
        %v499 = vmul.f32 %v496, %v498
        %v500 = vadd.f32 %v495, %v499
        %v501 = vld [vmem:[%s381] sm:$0xff]
        %s502 = sld [smem:[#allocation2 + $0x183]]
        %v503 = vstv %s502
        %v504 = vmul.f32 %v501, %v503
        %v505 = vadd.f32 %v500, %v504
        %s506 = scalar_lea.vmem %s424, 24 [#allocation12]
        %507 = vst [vmem:[%s506] sm:$0xff] %v505
        %s508 = sand.u32 %s201, 1
        %s509 = scalar_lea.sflag [#allocation4], %s508
        %s510 = sand.u32 %s201, 1
        %s511 = smul.addr %s510, 32
        %s512 = scalar_lea.vmem [#allocation12], %s511
        // Predicated region
        $region61: #{tpu_custom_call.1} parent=39 // pred_check
          %p513 = pneg %p211
        $region62: #{tpu_custom_call.1} parent=39 // pred_check_branch
          %515 = sbr.rel (%p513) target = $region64
        $region63: #{tpu_custom_call.1} parent=39 // pred_region
          %517 = vsyncadd %s509, 0
          %s518 = smul.addr %s35, 2
          %s519 = sadd.s32 %s36, %s518
          %s520 = smul.addr %s34, 16
          %s521 = sadd.s32 %s519, %s520
          %s522 = smul.addr %s521, 8
          %s523 = scalar_lea.hbm %s5, %s522
          %s524 = sshll.u32 %s512, 4
          %s525 = int_to_ptr.vmem [resolvable:$true] %s524
          %s526 = sshll.u32 %s523, 4
          %s527 = int_to_ptr.hbm [resolvable:$true] %s526
          %532 = dma.vmem_to_hbm [thread:$0]  %s525, 512, %s527, %s509, 128, 512, 8
        $region64: #{tpu_custom_call.1} parent=39 // pred_fallthru
          _
      $region40: #{tpu_custom_call.1} parent=5 // pred_fallthru
        _
      %p533 = scmp.le.s32.totalorder 2, %s24
      // Predicated region
      $region65: #{tpu_custom_call.1} parent=5 // pred_check
        %p534 = pneg %p533
      $region66: #{tpu_custom_call.1} parent=5 // pred_check_branch
        %536 = sbr.rel (%p534) target = $region68
      $region67: #{tpu_custom_call.1} parent=5 // pred_region
        %s537 = ssub.s32 %s24, 2
        // Predicated region
        $region69: #{tpu_custom_call.1} parent=67 // pred_check
          %p538 = pneg %p217
        $region70: #{tpu_custom_call.1} parent=67 // pred_check_branch
          %540 = sbr.rel (%p538) target = $region72
        $region71: #{tpu_custom_call.1} parent=67 // pred_region
          %s541 = sand.u32 %s202, 1
          %s542 = scalar_lea.sflag [#allocation4], %s541
          %s543 = sand.u32 %s202, 1
          %s544 = smul.addr %s543, 32
          %s545 = scalar_lea.vmem [#allocation12], %s544
          %547 = dma.done %s542, 512
        $region72: #{tpu_custom_call.1} parent=67 // pred_fallthru
          _
      $region68: #{tpu_custom_call.1} parent=5 // pred_fallthru
        _
    $region6: #{tpu_custom_call.1} parent=1 // loop_footer
      %s28 = sadd.s32 1, %s24
    $region7: #{tpu_custom_call.1} parent=1 // loop_footer_branch
      %23 = sbr.rel target = $region3
    $region8: #{tpu_custom_call.1} parent=1 // loop_exit
      _
    %548 = vsyncpa [#allocation3], 1
    %s549 = scalar_lea.sflag [#allocation3], 1
    %550 = vsyncpa %s549, 1
    %551 = vsyncpa [#allocation8], 1
    %s552 = scalar_lea.sflag [#allocation8], 1
    %553 = vsyncpa %s552, 1
    %554 = vsyncpa [#allocation11], 1
    %s555 = scalar_lea.sflag [#allocation11], 1
    %556 = vsyncpa %s555, 1
    %557 = vsyncpa [#allocation4], 1
    %s558 = scalar_lea.sflag [#allocation4], 1
    %559 = vsyncpa %s558, 1
    %560 = vsyncpa [#allocation5], 1
    %s561 = scalar_lea.sflag [#allocation5], 1
    %562 = vsyncpa %s561, 1

</llo_original>
